<compile_context>
chip_gen: v5e
topology: v5e:2x2
jax: 0.10.0
libtpu: 0.0.40
codegen_flags: <defaults>
</compile_context>

<pallas_src>
import jax
import jax.numpy as jnp
from jax.experimental import pallas as pl
from jax.experimental.pallas import tpu as pltpu


def _round_up(x, m):
    return (x + m - 1) // m * m


def _proj_kernel(x_ref, w_ref, b_ref, o_ref, acc_ref):
    # x_ref: (tm, tk)  w_ref: (tn, tk)  b_ref: (1, tn)
    # o_ref: (tm, tn)  acc_ref: (tm, tn) f32 scratch
    k = pl.program_id(2)

    @pl.when(k == 0)
    def _():
        # Fold the bias into the accumulator init (applied exactly once).
        acc_ref[...] = jnp.broadcast_to(
            b_ref[...].astype(jnp.float32), acc_ref.shape
        )

    # Contract the shared K axis of x (tm, tk) and W (tn, tk) directly — the
    # MXU consumes the transposed RHS natively, no wrapper-side transpose.
    acc_ref[...] += jax.lax.dot_general(
        x_ref[...],
        w_ref[...],
        dimension_numbers=(((1,), (1,)), ((), ())),
        preferred_element_type=jnp.float32,
    )

    @pl.when(k == pl.num_programs(2) - 1)
    def _():
        o_ref[...] = acc_ref[...].astype(o_ref.dtype)


def attention_projection(x, weight, bias, *, tm=256, tn=256, tk=512):
    """y = x @ weight.T + bias.

    x: (..., in_dim); weight: (out_dim, in_dim); bias: (out_dim,).
    """
    in_dim = x.shape[-1]
    out_dim = weight.shape[0]
    lead = x.shape[:-1]
    n = 1
    for d in lead:
        n *= d

    # Clamp default tiles to the (aligned) problem size so small shapes still
    # yield (8, 128)-aligned blocks; large shapes get the full tiled grid.
    tm = min(tm, _round_up(n, 8))          # sublane axis of x / out tiles
    tn = min(tn, _round_up(out_dim, 128))  # lane axis of out / bias tiles
    tk = min(tk, _round_up(in_dim, 128))   # lane axis of x / weight tiles

    n_p = _round_up(n, tm)
    out_p = _round_up(out_dim, tn)
    in_p = _round_up(in_dim, tk)

    # Zero-pad to tile multiples only when needed. K-padding contributes exact
    # zeros to the dot; padded M rows / N columns are sliced off after.
    x2d = x.reshape(n, in_dim)
    if (n_p, in_p) != (n, in_dim):
        x2d = jnp.pad(x2d, ((0, n_p - n), (0, in_p - in_dim)))
    w_p = weight
    if (out_p, in_p) != (out_dim, in_dim):
        w_p = jnp.pad(weight, ((0, out_p - out_dim), (0, in_p - in_dim)))
    b_p = bias
    if out_p != out_dim:
        b_p = jnp.pad(bias, (0, out_p - out_dim))
    b_p = b_p.reshape(1, out_p)

    grid = (n_p // tm, out_p // tn, in_p // tk)

    out_itemsize = jnp.dtype(x.dtype).itemsize
    cost = pl.CostEstimate(
        flops=2 * n * in_dim * out_dim,
        transcendentals=0,
        bytes_accessed=(
            x2d.size * jnp.dtype(x2d.dtype).itemsize
            + w_p.size * jnp.dtype(w_p.dtype).itemsize
            + b_p.size * jnp.dtype(b_p.dtype).itemsize
            + n_p * out_p * out_itemsize
        ),
    )

    out2d = pl.pallas_call(
        _proj_kernel,
        out_shape=jax.ShapeDtypeStruct((n_p, out_p), x.dtype),
        grid_spec=pltpu.PrefetchScalarGridSpec(
            num_scalar_prefetch=0,
            grid=grid,
            in_specs=[
                pl.BlockSpec((tm, tk), lambda i, j, k: (i, k)),   # x tile
                pl.BlockSpec((tn, tk), lambda i, j, k: (j, k)),   # W tile (native layout)
                pl.BlockSpec((1, tn), lambda i, j, k: (0, j)),    # bias tile
            ],
            out_specs=pl.BlockSpec((tm, tn), lambda i, j, k: (i, j)),
            scratch_shapes=[pltpu.VMEM((tm, tn), jnp.float32)],
        ),
        compiler_params=pltpu.CompilerParams(
            dimension_semantics=("parallel", "parallel", "arbitrary"),
        ),
        cost_estimate=cost,
    )(x2d, w_p, b_p)

    if (n_p, out_p) != (n, out_dim):
        out2d = out2d[:n, :out_dim]
    return out2d.reshape(*lead, out_dim)


def init_params(key, in_dim, out_dim, dtype=jnp.float32):
    # Deterministic init mirroring nn.Linear's default (uniform +/- 1/sqrt(in_dim)).
    k_w, k_b = jax.random.split(key)
    bound = 1.0 / (in_dim ** 0.5)
    weight = jax.random.uniform(k_w, (out_dim, in_dim), dtype, -bound, bound)
    bias = jax.random.uniform(k_b, (out_dim,), dtype, -bound, bound)
    return weight, bias


if __name__ == "__main__":
    key = jax.random.PRNGKey(0)
    k_x, k_p = jax.random.split(key)

    # student_outputs: (batch, seq, hidden); project to teacher head dim.
    batch, seq, in_dim, out_dim = 2, 8, 32, 64
    student_outputs = jax.random.normal(k_x, (batch, seq, in_dim), jnp.float32)
    weight, bias = init_params(k_p, in_dim, out_dim)

    y = attention_projection(student_outputs, weight, bias)
    jax.block_until_ready(y)

    # Reference check against plain JAX.
    y_ref = student_outputs @ weight.T + bias
    assert y.shape == (batch, seq, out_dim)
    assert jnp.allclose(y, y_ref, atol=1e-4, rtol=1e-4), (
        float(jnp.max(jnp.abs(y - y_ref)))
    )

    print("KERNEL_OK")
</pallas_src>

<mosaic_0001>
module attributes {stable_mosaic.version = 11 : i64} {
  func.func @_proj_kernel(%arg0: i32, %arg1: i32, %arg2: i32, %arg3: memref<16x128xf32, #tpu.memory_space<vmem>>, %arg4: memref<128x128xf32, #tpu.memory_space<vmem>>, %arg5: memref<1x128xf32, #tpu.memory_space<vmem>>, %arg6: memref<16x128xf32, #tpu.memory_space<vmem>>, %arg7: memref<16x128xf32, #tpu.memory_space<vmem>>) attributes {dimension_semantics = [#tpu.dimension_semantics<parallel>, #tpu.dimension_semantics<parallel>, #tpu.dimension_semantics<arbitrary>], iteration_bounds = array<i64: 1, 1, 1>, scalar_prefetch = 0 : i64, scratch_operands = 1 : i64, tpu.core_type = #tpu.core_type<tc>, window_params = [{transform_indices = @transform_0, window_bounds = array<i64: 16, 128>}, {transform_indices = @transform_1, window_bounds = array<i64: 128, 128>}, {transform_indices = @transform_2, window_bounds = array<i64: 1, 128>}, {transform_indices = @transform_3, window_bounds = array<i64: 16, 128>}]} {
    %c0_i32 = arith.constant 0 : i32
    %0 = arith.cmpi eq, %arg2, %c0_i32 : i32
    %1 = arith.extui %0 : i1 to i32
    %c0_i32_0 = arith.constant 0 : i32
    %2 = arith.cmpi ne, %1, %c0_i32_0 : i32
    scf.if %2 {
      %c0_10 = arith.constant 0 : index
      %c0_11 = arith.constant 0 : index
      %12 = vector.load %arg5[%c0_10, %c0_11] : memref<1x128xf32, #tpu.memory_space<vmem>>, vector<1x128xf32>
      %13 = vector.shape_cast %12 : vector<1x128xf32> to vector<1x128xf32>
      %14 = vector.broadcast %13 : vector<1x128xf32> to vector<16x128xf32>
      %c0_12 = arith.constant 0 : index
      %c0_13 = arith.constant 0 : index
      %15 = vector.load %arg7[%c0_12, %c0_13] : memref<16x128xf32, #tpu.memory_space<vmem>>, vector<16x128xf32>
      tpu.vector_store %arg7[%c0_12, %c0_13], %14 {strides = array<i32>} : memref<16x128xf32, #tpu.memory_space<vmem>>, vector<16x128xf32>,
    } else {
    }
    %c0 = arith.constant 0 : index
    %c0_1 = arith.constant 0 : index
    %3 = vector.load %arg7[%c0, %c0_1] : memref<16x128xf32, #tpu.memory_space<vmem>>, vector<16x128xf32>
    %c0_2 = arith.constant 0 : index
    %c0_3 = arith.constant 0 : index
    %4 = vector.load %arg3[%c0_2, %c0_3] : memref<16x128xf32, #tpu.memory_space<vmem>>, vector<16x128xf32>
    %c0_4 = arith.constant 0 : index
    %c0_5 = arith.constant 0 : index
    %5 = vector.load %arg4[%c0_4, %c0_5] : memref<128x128xf32, #tpu.memory_space<vmem>>, vector<128x128xf32>
    %cst = arith.constant dense<0.000000e+00> : vector<16x128xf32>
    %6 = tpu.matmul %4, %5, %cst {dimension_numbers = #tpu.dot_dimension_numbers<[1], [1], [0], [0], [0, 0, 1, 0], [], []>} : vector<16x128xf32>, vector<128x128xf32>, vector<16x128xf32> -> vector<16x128xf32>
    %7 = arith.addf %3, %6 : vector<16x128xf32>
    %c0_6 = arith.constant 0 : index
    %c0_7 = arith.constant 0 : index
    %8 = vector.load %arg7[%c0_6, %c0_7] : memref<16x128xf32, #tpu.memory_space<vmem>>, vector<16x128xf32>
    tpu.vector_store %arg7[%c0_6, %c0_7], %7 {strides = array<i32>} : memref<16x128xf32, #tpu.memory_space<vmem>>, vector<16x128xf32>,
    %c0_i32_8 = arith.constant 0 : i32
    %9 = arith.cmpi eq, %arg2, %c0_i32_8 : i32
    %10 = arith.extui %9 : i1 to i32
    %c0_i32_9 = arith.constant 0 : i32
    %11 = arith.cmpi ne, %10, %c0_i32_9 : i32
    scf.if %11 {
      %c0_10 = arith.constant 0 : index
      %c0_11 = arith.constant 0 : index
      %12 = vector.load %arg7[%c0_10, %c0_11] : memref<16x128xf32, #tpu.memory_space<vmem>>, vector<16x128xf32>
      %c0_12 = arith.constant 0 : index
      %c0_13 = arith.constant 0 : index
      %13 = vector.load %arg6[%c0_12, %c0_13] : memref<16x128xf32, #tpu.memory_space<vmem>>, vector<16x128xf32>
      tpu.vector_store %arg6[%c0_12, %c0_13], %12 {strides = array<i32>} : memref<16x128xf32, #tpu.memory_space<vmem>>, vector<16x128xf32>,
    } else {
    }
    return
  }
  func.func @transform_0(%arg0: i32, %arg1: i32, %arg2: i32) -> (i32, i32) {
    %c0_i32 = arith.constant 0 : i32
    return %arg0, %arg2 : i32, i32
  }
  func.func @transform_1(%arg0: i32, %arg1: i32, %arg2: i32) -> (i32, i32) {
    %c0_i32 = arith.constant 0 : i32
    return %arg1, %arg2 : i32, i32
  }
  func.func @transform_2(%arg0: i32, %arg1: i32, %arg2: i32) -> (i32, i32) {
    %c0_i32 = arith.constant 0 : i32
    %c0_i32_0 = arith.constant 0 : i32
    return %c0_i32, %arg1 : i32, i32
  }
  func.func @transform_3(%arg0: i32, %arg1: i32, %arg2: i32) -> (i32, i32) {
    %c0_i32 = arith.constant 0 : i32
    return %arg0, %arg1 : i32, i32
  }
}

</mosaic_0001>

<llo_original>
// kernel: tpu_custom_call.1
$region0: #{tpu_custom_call.1}
  #allocation0 [shape = 'u32[]', space=smem, size = 0x4, offset = 0x4, fixed_abs, tag = 'smem constant byte address 0x4 - core index']
  #allocation1 [shape = 'u32[72,128]{1,0:T(1,128)}', space=vmem, size = 0x9000, scoped, tag = 'internal scratch']
  #allocation2 [shape = 'f32[16,128]{1,0:T(8,128)}', space=vmem, size = 0x2000, scoped, tag = 'scratch operand']
  %s0 = inlined_call_operand.hbm [shape: f32[16,128], index: 0, kind: input, shape index: {}]
  %s1 = inlined_call_operand.hbm [shape: f32[128,128], index: 1, kind: input, shape index: {}]
  %s2 = inlined_call_operand.vmem [shape: f32[1,128], index: 2, kind: input, shape index: {}]
  %s3 = inlined_call_operand.hbm [shape: f32[16,128], index: 3, kind: output, shape index: {}]
  %s4 = sld [smem:[#allocation0]]
  $region38: #{tpu_custom_call.1} parent=0
    _
  %s6 = ssub.s32 1, %s4
  %s7 = scalar_select 0, %s6, %s4
  $region1: #{tpu_custom_call.1} parent=0
    #allocation3 [shape = 'u8[8192]{0}', space=vmem, size = 0x2000, scoped, tag = 'input window, operand 0, single buffered']
    #allocation4 [shape = 's32[1]{0}', space=sflag, size = 0x4, scoped, tag = 'scoped memory for tpu_custom_call.1']
    #allocation5 [shape = 's32[1]{0}', space=sflag, size = 0x4, scoped, tag = 'scoped memory for tpu_custom_call.1']
    #allocation6 [shape = 'u8[65536]{0}', space=vmem, size = 0x10000, scoped, tag = 'input window, operand 1, single buffered']
    #allocation7 [shape = 's32[1]{0}', space=sflag, size = 0x4, scoped, tag = 'scoped memory for tpu_custom_call.1']
    #allocation8 [shape = 'u8[8192]{0}', space=vmem, size = 0x2000, scoped, tag = 'output window, operand 0, single buffered']
    %8 = vsyncpa [#allocation4], 0
    %9 = vsyncpa [#allocation7], 0
    %10 = vsyncpa [#allocation5], 0
    // Predicated region
    $region2: #{tpu_custom_call.1} parent=1 // pred_check
      _
    $region3: #{tpu_custom_call.1} parent=1 // pred_check_branch
      %12 = sbr.rel (0) target = $region5
    $region4: #{tpu_custom_call.1} parent=1 // pred_region
      %14 = vsyncadd [#allocation4], 0
      %s15 = sshll.u32 %s0, 4
      %s16 = int_to_ptr.hbm [resolvable:$true] %s15
      %s17 = sshll.u32 [#allocation3], 4
      %s18 = int_to_ptr.vmem [resolvable:$true] %s17
      %23 = dma.hbm_to_vmem [thread:$0]  %s16, 256, %s18, [#allocation4], 128, 128, 8
    $region5: #{tpu_custom_call.1} parent=1 // pred_fallthru
      _
    // Predicated region
    $region6: #{tpu_custom_call.1} parent=1 // pred_check
      _
    $region7: #{tpu_custom_call.1} parent=1 // pred_check_branch
      %25 = sbr.rel (0) target = $region9
    $region8: #{tpu_custom_call.1} parent=1 // pred_region
      %27 = vsyncadd [#allocation7], 0
      %s28 = sshll.u32 %s1, 4
      %s29 = int_to_ptr.hbm [resolvable:$true] %s28
      %s30 = sshll.u32 [#allocation6], 4
      %s31 = int_to_ptr.vmem [resolvable:$true] %s30
      %36 = dma.hbm_to_vmem [thread:$0]  %s29, 2048, %s31, [#allocation7], 128, 128, 8
    $region9: #{tpu_custom_call.1} parent=1 // pred_fallthru
      _
    // Predicated region
    $region10: #{tpu_custom_call.1} parent=1 // pred_check
      _
    $region11: #{tpu_custom_call.1} parent=1 // pred_check_branch
      %38 = sbr.rel (0) target = $region13
    $region12: #{tpu_custom_call.1} parent=1 // pred_region
      _
    $region13: #{tpu_custom_call.1} parent=1 // pred_fallthru
      _
    // Predicated region
    $region14: #{tpu_custom_call.1} parent=1 // pred_check
      _
    $region15: #{tpu_custom_call.1} parent=1 // pred_check_branch
      %40 = sbr.rel (0) target = $region17
    $region16: #{tpu_custom_call.1} parent=1 // pred_region
      %42 = dma.done [#allocation4], 256
    $region17: #{tpu_custom_call.1} parent=1 // pred_fallthru
      _
    // Predicated region
    $region18: #{tpu_custom_call.1} parent=1 // pred_check
      _
    $region19: #{tpu_custom_call.1} parent=1 // pred_check_branch
      %44 = sbr.rel (0) target = $region21
    $region20: #{tpu_custom_call.1} parent=1 // pred_region
      %46 = dma.done [#allocation7], 2048
    $region21: #{tpu_custom_call.1} parent=1 // pred_fallthru
      _
    %p47 = scmp.eq.s32.totalorder 0, 0
    // Predicated region
    $region22: #{tpu_custom_call.1} parent=1 // pred_check
      %p48 = pneg %p47
    $region23: #{tpu_custom_call.1} parent=1 // pred_check_branch
      %50 = sbr.rel (%p48) target = $region25
    $region24: #{tpu_custom_call.1} parent=1 // pred_region
      %v51 = vld [vmem:[%s2] sm:$0x1]
      %v53 = vperm.slane %v51, 0
      %55 = vst [vmem:[#allocation2] sm:$0xff] %v53
      %56 = vst [vmem:[#allocation2 + $0x8] sm:$0xff] %v53
    $region25: #{tpu_custom_call.1} parent=1 // pred_fallthru
      _
    %v57 = vld [vmem:[#allocation2] sm:$0xff]
    %v58 = vld [vmem:[#allocation2 + $0x8] sm:$0xff]
    %v59 = vld [vmem:[#allocation3] sm:$0xff]
    %v60 = vld [vmem:[#allocation3 + $0x8] sm:$0xff]
    %v61 = vld [vmem:[#allocation6] sm:$0xff]
    %v62 = vld [vmem:[#allocation6 + $0x8] sm:$0xff]
    %v63 = vld [vmem:[#allocation6 + $0x10] sm:$0xff]
    %v64 = vld [vmem:[#allocation6 + $0x18] sm:$0xff]
    %v65 = vld [vmem:[#allocation6 + $0x20] sm:$0xff]
    %v66 = vld [vmem:[#allocation6 + $0x28] sm:$0xff]
    %v67 = vld [vmem:[#allocation6 + $0x30] sm:$0xff]
    %v68 = vld [vmem:[#allocation6 + $0x38] sm:$0xff]
    %v69 = vld [vmem:[#allocation6 + $0x40] sm:$0xff]
    %v70 = vld [vmem:[#allocation6 + $0x48] sm:$0xff]
    %v71 = vld [vmem:[#allocation6 + $0x50] sm:$0xff]
    %v72 = vld [vmem:[#allocation6 + $0x58] sm:$0xff]
    %v73 = vld [vmem:[#allocation6 + $0x60] sm:$0xff]
    %v74 = vld [vmem:[#allocation6 + $0x68] sm:$0xff]
    %v75 = vld [vmem:[#allocation6 + $0x70] sm:$0xff]
    %v76 = vld [vmem:[#allocation6 + $0x78] sm:$0xff]
    %77 = vmatpush.xpose.msra.mxu0 %v76
    %78 = vmatpush.xpose.msra.mxu0 %v75
    %79 = vmatpush.xpose.msra.mxu0 %v74
    %80 = vmatpush.xpose.msra.mxu0 %v73
    %81 = vmatpush.xpose.msra.mxu0 %v72
    %82 = vmatpush.xpose.msra.mxu0 %v71
    %83 = vmatpush.xpose.msra.mxu0 %v70
    %84 = vmatpush.xpose.msra.mxu0 %v69
    %85 = vmatpush.xpose.msra.mxu0 %v68
    %86 = vmatpush.xpose.msra.mxu0 %v67
    %87 = vmatpush.xpose.msra.mxu0 %v66
    %88 = vmatpush.xpose.msra.mxu0 %v65
    %89 = vmatpush.xpose.msra.mxu0 %v64
    %90 = vmatpush.xpose.msra.mxu0 %v63
    %91 = vmatpush.xpose.msra.mxu0 %v62
    %92 = vmatpush.xpose.msra.mxu0 %v61
    %93 = vmatmul.f32.gmra.mxu0 %v59
    %v94 = vpop.f32.mrf.mxu0
    %v95 = vadd.f32 0.0, %v94
    %96 = vmatmul.f32.gmra.mxu0 %v60
    %v97 = vpop.f32.mrf.mxu0
    %v98 = vadd.f32 0.0, %v97
    %99 = vdwg.mxu0
    %v100 = vadd.f32 %v57, %v95
    %v101 = vadd.f32 %v58, %v98
    %102 = vst [vmem:[#allocation2] sm:$0xff] %v100
    %103 = vst [vmem:[#allocation2 + $0x8] sm:$0xff] %v101
    // Predicated region
    $region26: #{tpu_custom_call.1} parent=1 // pred_check
      %p104 = pneg %p47
    $region27: #{tpu_custom_call.1} parent=1 // pred_check_branch
      %106 = sbr.rel (%p104) target = $region29
    $region28: #{tpu_custom_call.1} parent=1 // pred_region
      %v107 = vld [vmem:[#allocation2] sm:$0xff]
      %v108 = vld [vmem:[#allocation2 + $0x8] sm:$0xff]
      %109 = vst [vmem:[#allocation8] sm:$0xff] %v107
      %110 = vst [vmem:[#allocation8 + $0x8] sm:$0xff] %v108
    $region29: #{tpu_custom_call.1} parent=1 // pred_fallthru
      _
    // Predicated region
    $region30: #{tpu_custom_call.1} parent=1 // pred_check
      _
    $region31: #{tpu_custom_call.1} parent=1 // pred_check_branch
      %112 = sbr.rel (0) target = $region33
    $region32: #{tpu_custom_call.1} parent=1 // pred_region
      %114 = vsyncadd [#allocation5], 0
      %s115 = sshll.u32 [#allocation8], 4
      %s116 = int_to_ptr.vmem [resolvable:$true] %s115
      %s117 = sshll.u32 %s3, 4
      %s118 = int_to_ptr.hbm [resolvable:$true] %s117
      %123 = dma.vmem_to_hbm [thread:$0]  %s116, 256, %s118, [#allocation5], 128, 128, 8
    $region33: #{tpu_custom_call.1} parent=1 // pred_fallthru
      _
    // Predicated region
    $region34: #{tpu_custom_call.1} parent=1 // pred_check
      _
    $region35: #{tpu_custom_call.1} parent=1 // pred_check_branch
      %125 = sbr.rel (0) target = $region37
    $region36: #{tpu_custom_call.1} parent=1 // pred_region
      %127 = dma.done [#allocation5], 256
    $region37: #{tpu_custom_call.1} parent=1 // pred_fallthru
      _
    %128 = vsyncpa [#allocation4], 1
    %129 = vsyncpa [#allocation7], 1
    %130 = vsyncpa [#allocation5], 1

</llo_original>
